<compile_context>
chip_gen: v5e
topology: v5e:2x2
jax: 0.10.0
libtpu: 0.0.40
codegen_flags: <defaults>
</compile_context>

<pallas_src>
import math

import jax
import jax.numpy as jnp
from jax.experimental import pallas as pl
from jax.experimental.pallas import tpu as pltpu


# ---------------------------------------------------------------------------
# PE buffer construction (identical to the torch __init__).
# ---------------------------------------------------------------------------
def build_pe(d_model: int, max_len: int = 512, dtype=jnp.float32):
    max_len = max_len * 2
    position = jnp.arange(max_len, dtype=jnp.float32)[:, None]                 # (L, 1)
    div_term = jnp.exp(
        jnp.arange(0, d_model, 2, dtype=jnp.float32) * (-math.log(10000.0) / d_model)
    )                                                                          # (D/2,)
    angles = position * div_term                                               # (L, D/2)
    # interleave: even cols = sin, odd cols = cos
    pe = jnp.stack([jnp.sin(angles), jnp.cos(angles)], axis=-1)                # (L, D/2, 2)
    pe = pe.reshape(max_len, d_model)[None, :, :].astype(dtype)                # (1, L, D)
    return pe


# ---------------------------------------------------------------------------
# Kernel: broadcast-add of a single PE row onto a (tile_rows, tile_cols) tile.
# ---------------------------------------------------------------------------
def _pe_add_kernel(x_ref, pe_ref, o_ref):
    # x_ref: (TS, TC), pe_ref: (1, TC) -> jnp broadcasting over the row axis.
    o_ref[...] = x_ref[...] + pe_ref[...]


# ---------------------------------------------------------------------------
# Tile selection.
# ---------------------------------------------------------------------------
_LANE = 128
_VMEM_BUDGET_BYTES = 48 * 1024 * 1024   # fits inside v7x's 64 MiB physical VMEM
_TARGET_TILE_BYTES = 8 * 1024 * 1024    # ~8 MiB tiles (review: 4-8 MiB sweet spot)


def _sublane(dtype) -> int:
    """Native sublane packing: rows per vreg sublane group for this dtype."""
    return {4: 8, 2: 16, 1: 32}.get(jnp.dtype(dtype).itemsize, 8)


def _round_up(x: int, m: int) -> int:
    return ((x + m - 1) // m) * m


def _pick_tile_cols(C: int, itemsize: int, sublane: int, target_bytes: int) -> int:
    """Full lane width unless even a minimal-row tile would blow the VMEM budget."""
    if sublane * C * itemsize <= target_bytes:
        return C
    tc = (target_bytes // (sublane * itemsize)) // _LANE * _LANE
    return max(_LANE, min(tc, C))


def _pick_tile_rows(S: int, row_bytes: int, sublane: int, target_bytes: int) -> int:
    """Sequence-tile size: large, VMEM-budgeted, sublane aligned, >=2 grid steps
    when S allows (v7x dual TC), and a divisor of S when cheaply possible."""
    ts = max(sublane, target_bytes // max(row_bytes, 1))
    if S >= 2 * sublane:
        # Guarantee at least two grid steps so v7x's two TensorCores both get work.
        ts = min(ts, _round_up(pl.cdiv(S, 2), sublane))
    if ts >= S:
        return S
    ts = max(sublane, (ts // sublane) * sublane)
    if ts >= S:
        return S
    # Prefer a tile size that divides S (no ragged / masked final block),
    # without shrinking the tile by more than 2x.
    cand = ts
    while cand >= max(sublane, ts // 2):
        if S % cand == 0:
            return cand
        cand -= sublane
    return ts


# ---------------------------------------------------------------------------
# Wrapper.
# ---------------------------------------------------------------------------
def positional_encoding_forward(x, pe, *, tile_rows=None, donate_x=False,
                                xla_fallback_bytes=0):
    """x: [S, B, D] float array.  pe: (1, 2*max_len, D) buffer from build_pe.

    donate_x: if the caller donates x, alias the output onto x's HBM buffer.
    xla_fallback_bytes: if S*B*D*itemsize <= this, skip the pallas_call and do
      the add in plain XLA (a standalone tiny add is dominated by call/step
      overhead; longer term this op should be fused into a neighboring kernel).
    """
    S, B, D = x.shape
    BD = B * D
    itemsize = jnp.dtype(x.dtype).itemsize

    # torch: x + pe.repeat((S, 1, 1))[:, :B, :]  ==  x + pe[0, :B, :][None]
    # Cast pe to x.dtype so bf16 inputs stay on the bf16 VPU path in-kernel.
    pe_row = pe[0, :B, :].astype(x.dtype).reshape(1, BD)   # (1, B*D)
    x2 = x.reshape(S, BD)                                  # (S, B*D), lane-dense

    if S * BD * itemsize <= xla_fallback_bytes:
        return (x2 + pe_row).reshape(S, B, D)

    # Lane-dense padding: last axis a multiple of 128 -> full-width vst.
    BD_p = _round_up(BD, _LANE)
    if BD_p != BD:
        pad = BD_p - BD
        x2 = jnp.pad(x2, ((0, 0), (0, pad)))
        pe_row = jnp.pad(pe_row, ((0, 0), (0, pad)))

    sublane = _sublane(x.dtype)
    # Budget: 2x in-tile + 2x out-tile (double buffering) + 2x pe tile + slack.
    target_bytes = min(_TARGET_TILE_BYTES, (_VMEM_BUDGET_BYTES - (2 << 20)) // 5)

    tile_cols = _pick_tile_cols(BD_p, itemsize, sublane, target_bytes)
    if tile_rows is None:
        tile_rows = _pick_tile_rows(S, tile_cols * itemsize, sublane, target_bytes)
    else:
        tile_rows = min(int(tile_rows), S)
        if tile_rows < S:
            tile_rows = max(sublane, (tile_rows // sublane) * sublane)

    grid = (pl.cdiv(S, tile_rows), pl.cdiv(BD_p, tile_cols))

    # Explicit VMEM limit sized to actual usage + headroom (fixes v5e's 16 MiB
    # scoped default for big tiles; stays inside v7x's 64 MiB physical VMEM).
    tile_bytes = tile_rows * tile_cols * itemsize
    pe_tile_bytes = tile_cols * itemsize
    vmem_limit = 4 * tile_bytes + 2 * pe_tile_bytes + (4 << 20)
    vmem_limit = int(min(max(vmem_limit, 16 << 20), 56 << 20))

    cost = pl.CostEstimate(
        flops=S * BD_p,
        transcendentals=0,
        bytes_accessed=(2 * S * BD_p + BD_p) * itemsize,
    )

    extra_kwargs = {}
    if donate_x:
        extra_kwargs["input_output_aliases"] = {0: 0}

    out2 = pl.pallas_call(
        _pe_add_kernel,
        out_shape=jax.ShapeDtypeStruct((S, BD_p), x.dtype),
        grid=grid,
        in_specs=[
            pl.BlockSpec((tile_rows, tile_cols), lambda i, j: (i, j)),  # x tile, pipelined
            pl.BlockSpec((1, tile_cols), lambda i, j: (0, j)),          # pe: constant over rows
        ],
        out_specs=pl.BlockSpec((tile_rows, tile_cols), lambda i, j: (i, j)),
        compiler_params=pltpu.CompilerParams(
            dimension_semantics=("parallel", "parallel"),   # v7x dual-TC sharding; no-op v5e/v6e
            vmem_limit_bytes=vmem_limit,
        ),
        cost_estimate=cost,
        **extra_kwargs,
    )(x2, pe_row)

    if BD_p != BD:
        out2 = out2[:, :BD]

    # TODO(synk): nn.Dropout(p=0.1) is identity in eval mode; training-mode dropout
    # would need in-kernel pltpu.prng_seed/prng_random_bits and is not applied here.
    return out2.reshape(S, B, D)


if __name__ == "__main__":
    key = jax.random.PRNGKey(0)

    # 1) Small, module-consistent shapes: seq=8, batch=2, embed=32.
    #    B*D = 64 -> exercises the lane-padding-to-128 path.
    S, B, D = 8, 2, 32
    x = jax.random.normal(key, (S, B, D), dtype=jnp.float32)
    pe = build_pe(d_model=D, max_len=512)
    out = jax.block_until_ready(positional_encoding_forward(x, pe))
    ref = x + pe[0, :B, :][None, :, :]
    assert out.shape == (S, B, D)
    assert jnp.allclose(out, ref, atol=1e-6), "mismatch vs reference (small case)"

    # 2) Tiled/pipelined path incl. a ragged last tile (explicit tile_rows).
    S2, B2, D2 = 300, 4, 64   # B*D = 256 (lane-dense), grid = (cdiv(300,64), 1)
    x2 = jax.random.normal(jax.random.PRNGKey(1), (S2, B2, D2), dtype=jnp.float32)
    pe2 = build_pe(d_model=D2, max_len=512)
    out2 = jax.block_until_ready(positional_encoding_forward(x2, pe2, tile_rows=64))
    ref2 = x2 + pe2[0, :B2, :][None, :, :]
    assert jnp.allclose(out2, ref2, atol=1e-6), "mismatch vs reference (tiled case)"

    # 3) bf16 + auto tile selection (sublane=16 rounding, divisor-of-S snap).
    S3, B3, D3 = 320, 2, 128
    x3 = jax.random.normal(jax.random.PRNGKey(2), (S3, B3, D3)).astype(jnp.bfloat16)
    pe3 = build_pe(d_model=D3, max_len=512)
    out3 = jax.block_until_ready(positional_encoding_forward(x3, pe3))
    ref3 = x3 + pe3[0, :B3, :].astype(jnp.bfloat16)[None, :, :]
    assert jnp.allclose(out3.astype(jnp.float32), ref3.astype(jnp.float32), atol=1e-2), \
        "mismatch vs reference (bf16 auto-tile case)"

    # 4) Tiny-workload XLA fallback path.
    out4 = jax.block_until_ready(
        positional_encoding_forward(x, pe, xla_fallback_bytes=1 << 20))
    assert jnp.allclose(out4, ref, atol=1e-6), "mismatch vs reference (fallback case)"

    print("KERNEL_OK")
</pallas_src>

<mosaic_0001>
module attributes {stable_mosaic.version = 11 : i64} {
  func.func @_pe_add_kernel(%arg0: i32, %arg1: i32, %arg2: memref<8x128xf32, #tpu.memory_space<vmem>>, %arg3: memref<1x128xf32, #tpu.memory_space<vmem>>, %arg4: memref<8x128xf32, #tpu.memory_space<vmem>>) attributes {dimension_semantics = [#tpu.dimension_semantics<parallel>, #tpu.dimension_semantics<parallel>], iteration_bounds = array<i64: 1, 1>, scalar_prefetch = 0 : i64, scratch_operands = 0 : i64, tpu.core_type = #tpu.core_type<tc>, window_params = [{transform_indices = @transform_0, window_bounds = array<i64: 8, 128>}, {transform_indices = @transform_1, window_bounds = array<i64: 1, 128>}, {transform_indices = @transform_2, window_bounds = array<i64: 8, 128>}]} {
    %c0 = arith.constant 0 : index
    %c0_0 = arith.constant 0 : index
    %0 = vector.load %arg2[%c0, %c0_0] : memref<8x128xf32, #tpu.memory_space<vmem>>, vector<8x128xf32>
    %c0_1 = arith.constant 0 : index
    %c0_2 = arith.constant 0 : index
    %1 = vector.load %arg3[%c0_1, %c0_2] : memref<1x128xf32, #tpu.memory_space<vmem>>, vector<1x128xf32>
    %2 = vector.broadcast %1 : vector<1x128xf32> to vector<8x128xf32>
    %3 = arith.addf %0, %2 : vector<8x128xf32>
    %c0_3 = arith.constant 0 : index
    %c0_4 = arith.constant 0 : index
    %4 = vector.load %arg4[%c0_3, %c0_4] : memref<8x128xf32, #tpu.memory_space<vmem>>, vector<8x128xf32>
    tpu.vector_store %arg4[%c0_3, %c0_4], %3 {strides = array<i32>} : memref<8x128xf32, #tpu.memory_space<vmem>>, vector<8x128xf32>,
    return
  }
  func.func @transform_0(%arg0: i32, %arg1: i32) -> (i32, i32) {
    %c0_i32 = arith.constant 0 : i32
    return %arg0, %arg1 : i32, i32
  }
  func.func @transform_1(%arg0: i32, %arg1: i32) -> (i32, i32) {
    %c0_i32 = arith.constant 0 : i32
    %c0_i32_0 = arith.constant 0 : i32
    return %c0_i32, %arg1 : i32, i32
  }
  func.func @transform_2(%arg0: i32, %arg1: i32) -> (i32, i32) {
    %c0_i32 = arith.constant 0 : i32
    return %arg0, %arg1 : i32, i32
  }
}

</mosaic_0001>

<llo_original>
// kernel: tpu_custom_call.1
$region0: #{tpu_custom_call.1}
  #allocation0 [shape = 'u32[]', space=smem, size = 0x4, offset = 0x4, fixed_abs, tag = 'smem constant byte address 0x4 - core index']
  #allocation1 [shape = 'u32[72,128]{1,0:T(1,128)}', space=vmem, size = 0x9000, scoped, tag = 'internal scratch']
  %s0 = inlined_call_operand.hbm [shape: f32[8,128], index: 0, kind: input, shape index: {}]
  %s1 = inlined_call_operand.hbm [shape: f32[1,128], index: 1, kind: input, shape index: {}]
  %s2 = inlined_call_operand.hbm [shape: f32[8,128], index: 2, kind: output, shape index: {}]
  %s3 = sld [smem:[#allocation0]]
  $region26: #{tpu_custom_call.1} parent=0
    _
  %s5 = ssub.s32 1, %s3
  %s6 = scalar_select 0, %s5, %s3
  $region1: #{tpu_custom_call.1} parent=0
    #allocation2 [shape = 'u8[4096]{0}', space=vmem, size = 0x1000, scoped, tag = 'input window, operand 0, single buffered']
    #allocation3 [shape = 's32[1]{0}', space=sflag, size = 0x4, scoped, tag = 'scoped memory for tpu_custom_call.1']
    #allocation4 [shape = 's32[1]{0}', space=sflag, size = 0x4, scoped, tag = 'scoped memory for tpu_custom_call.1']
    #allocation5 [shape = 'u8[512]{0}', space=vmem, size = 0x400, scoped, tag = 'input window, operand 1, single buffered']
    #allocation6 [shape = 's32[1]{0}', space=sflag, size = 0x4, scoped, tag = 'scoped memory for tpu_custom_call.1']
    #allocation7 [shape = 'u8[4096]{0}', space=vmem, size = 0x1000, scoped, tag = 'output window, operand 0, single buffered']
    %7 = vsyncpa [#allocation3], 0
    %8 = vsyncpa [#allocation6], 0
    %9 = vsyncpa [#allocation4], 0
    // Predicated region
    $region2: #{tpu_custom_call.1} parent=1 // pred_check
      _
    $region3: #{tpu_custom_call.1} parent=1 // pred_check_branch
      %11 = sbr.rel (0) target = $region5
    $region4: #{tpu_custom_call.1} parent=1 // pred_region
      %13 = vsyncadd [#allocation3], 0
      %s15 = sshll.u32 %s0, 4
      %s16 = int_to_ptr.hbm [resolvable:$true] %s15
      %s17 = sshll.u32 [#allocation2], 4
      %s18 = int_to_ptr.vmem [resolvable:$true] %s17
      %20 = dma.hbm_to_vmem [thread:$0]  %s16, 128, %s18, [#allocation3]
    $region5: #{tpu_custom_call.1} parent=1 // pred_fallthru
      _
    // Predicated region
    $region6: #{tpu_custom_call.1} parent=1 // pred_check
      _
    $region7: #{tpu_custom_call.1} parent=1 // pred_check_branch
      %22 = sbr.rel (0) target = $region9
    $region8: #{tpu_custom_call.1} parent=1 // pred_region
      %24 = vsyncadd [#allocation6], 0
      %s26 = sshll.u32 %s1, 4
      %s27 = int_to_ptr.hbm [resolvable:$true] %s26
      %s28 = sshll.u32 [#allocation5], 4
      %s29 = int_to_ptr.vmem [resolvable:$true] %s28
      %31 = dma.hbm_to_vmem [thread:$0]  %s27, 16, %s29, [#allocation6]
    $region9: #{tpu_custom_call.1} parent=1 // pred_fallthru
      _
    // Predicated region
    $region10: #{tpu_custom_call.1} parent=1 // pred_check
      _
    $region11: #{tpu_custom_call.1} parent=1 // pred_check_branch
      %33 = sbr.rel (0) target = $region13
    $region12: #{tpu_custom_call.1} parent=1 // pred_region
      %35 = dma.done [#allocation3], 128
    $region13: #{tpu_custom_call.1} parent=1 // pred_fallthru
      _
    // Predicated region
    $region14: #{tpu_custom_call.1} parent=1 // pred_check
      _
    $region15: #{tpu_custom_call.1} parent=1 // pred_check_branch
      %37 = sbr.rel (0) target = $region17
    $region16: #{tpu_custom_call.1} parent=1 // pred_region
      %39 = dma.done [#allocation6], 16
    $region17: #{tpu_custom_call.1} parent=1 // pred_fallthru
      _
    %v40 = vld [vmem:[#allocation2] sm:$0xff]
    %v41 = vld [vmem:[#allocation5] sm:$0x1]
    %v43 = vperm.slane %v41, 0
    %v45 = vadd.f32 %v40, %v43
    %46 = vst [vmem:[#allocation7] sm:$0xff] %v45
    // Predicated region
    $region18: #{tpu_custom_call.1} parent=1 // pred_check
      _
    $region19: #{tpu_custom_call.1} parent=1 // pred_check_branch
      %48 = sbr.rel (0) target = $region21
    $region20: #{tpu_custom_call.1} parent=1 // pred_region
      %50 = vsyncadd [#allocation4], 0
      %s52 = sshll.u32 [#allocation7], 4
      %s53 = int_to_ptr.vmem [resolvable:$true] %s52
      %s54 = sshll.u32 %s2, 4
      %s55 = int_to_ptr.hbm [resolvable:$true] %s54
      %57 = dma.vmem_to_hbm [thread:$0]  %s53, 128, %s55, [#allocation4]
    $region21: #{tpu_custom_call.1} parent=1 // pred_fallthru
      _
    // Predicated region
    $region22: #{tpu_custom_call.1} parent=1 // pred_check
      _
    $region23: #{tpu_custom_call.1} parent=1 // pred_check_branch
      %59 = sbr.rel (0) target = $region25
    $region24: #{tpu_custom_call.1} parent=1 // pred_region
      %61 = dma.done [#allocation4], 128
    $region25: #{tpu_custom_call.1} parent=1 // pred_fallthru
      _
    %62 = vsyncpa [#allocation3], 1
    %63 = vsyncpa [#allocation6], 1
    %64 = vsyncpa [#allocation4], 1

</llo_original>
